<compile_context>
chip_gen: v5e
topology: v5e:2x2
jax: 0.10.0
libtpu: 0.0.40
codegen_flags: <defaults>
</compile_context>

<pallas_src>
import jax
import jax.numpy as jnp
from jax.experimental import pallas as pl
from jax.experimental.pallas import tpu as pltpu


def svd_net_kernel(x_ref, px_ref, u_ref, ut_ref, recon_ref, z_ref):
    # x_ref:     (B, D)        flattened frames
    # px_ref:    (B, latent)   p_x placed in the last 2 columns, zeros elsewhere
    # u_ref:     (D, latent)   U zero-padded with 2 extra columns
    # ut_ref:    (latent, D)   U.T zero-padded with 2 extra (zero) rows
    # recon_ref: (B, D)
    # z_ref:     (B, latent)
    x = x_ref[...]

    # Encoder: z = x @ U (the padded columns produce exact zeros there).
    z = jnp.dot(x, u_ref[...], preferred_element_type=jnp.float32)

    # torch.cat((z, p_x), dim=-1) == z_padded + p_x_placed (disjoint support).
    z_full = z + px_ref[...]
    z_ref[...] = z_full

    # Decoder: recon = z @ U.T.  The two zero rows of the padded U.T guarantee
    # the p_x columns of z_full contribute nothing (exactly reproduces the
    # unpadded decoder).
    recon_ref[...] = jnp.dot(z_full, ut_ref[...],
                             preferred_element_type=jnp.float32)


def svd_net_forward(frames, p_x, U, *, grid_size, n_channels):
    """frames: (B, C, H, W); p_x: (B, 2); U: (C*H*W, latent-2).
    Returns (recon (B, C, H, W), z (B, latent)) like SVD_Net.forward."""
    B = frames.shape[0]
    D = n_channels * grid_size[0] * grid_size[1]
    nC = U.shape[1]
    n_px = p_x.shape[1]
    latent = nC + n_px

    # Wrapper-side layout plumbing (no compute hoisting):
    x_flat = frames.reshape(B, D).astype(jnp.float32)
    u_pad = jnp.pad(U.astype(jnp.float32), ((0, 0), (0, n_px)))      # (D, latent)
    ut_pad = u_pad.T                                                  # (latent, D)
    px_placed = jnp.pad(p_x.astype(jnp.float32), ((0, 0), (nC, 0)))   # (B, latent)

    recon_flat, z_full = pl.pallas_call(
        svd_net_kernel,
        out_shape=(jax.ShapeDtypeStruct((B, D), jnp.float32),
                   jax.ShapeDtypeStruct((B, latent), jnp.float32)),
        grid_spec=pltpu.PrefetchScalarGridSpec(
            num_scalar_prefetch=0,
            # Whole batch in one grid step: at these sizes everything fits in a
            # couple of vregs, so a grid over B would be pure per-step overhead.
            # (For large B, tile the batch here with blocks of >=128 rows.)
            grid=(1,),
            in_specs=[
                pl.BlockSpec((B, D), lambda i: (0, 0)),
                pl.BlockSpec((B, latent), lambda i: (0, 0)),
                pl.BlockSpec((D, latent), lambda i: (0, 0)),
                pl.BlockSpec((latent, D), lambda i: (0, 0)),
            ],
            out_specs=(
                pl.BlockSpec((B, D), lambda i: (0, 0)),
                pl.BlockSpec((B, latent), lambda i: (0, 0)),
            ),
        ),
        compiler_params=pltpu.CompilerParams(
            dimension_semantics=("arbitrary",)),
    )(x_flat, px_placed, u_pad, ut_pad)

    recon = recon_flat.reshape(B, n_channels, *grid_size)
    return recon, z_full


def svd_net_reference(frames, p_x, U, *, grid_size, n_channels):
    """Pure-JAX reference following the PyTorch module line by line."""
    B = frames.shape[0]
    x = frames.reshape(B, -1)
    z = jnp.dot(x, U, precision=jax.lax.Precision.HIGHEST)            # encoder
    R = jnp.dot(U, z.T, precision=jax.lax.Precision.HIGHEST)          # decoder
    recon = R.T.reshape(B, n_channels, *grid_size)
    z_out = jnp.concatenate([z, p_x], axis=-1)
    return recon, z_out


if __name__ == "__main__":
    B = 2
    N_CHANNELS = 1
    GRID = (16, 16)                      # (meta_gridSize, get_Ny(args))
    META_LATENT = 16                     # args.meta_latent_dimension
    NC = META_LATENT - 2                 # columns of U kept by SVD_Net
    D = N_CHANNELS * GRID[0] * GRID[1]

    key = jax.random.PRNGKey(0)
    kx, kp, ku = jax.random.split(key, 3)
    frames = jax.random.normal(kx, (B, N_CHANNELS, *GRID), jnp.float32)
    p_x = jax.random.normal(kp, (B, 2), jnp.float32)
    # TODO(synk): get_SVD_vectors loads a precomputed SVD basis from disk; a
    # deterministic synthetic basis is used here instead.
    U = jax.random.normal(ku, (D, NC), jnp.float32) / jnp.sqrt(D)

    recon, z = svd_net_forward(frames, p_x, U,
                               grid_size=GRID, n_channels=N_CHANNELS)
    recon = jax.block_until_ready(recon)
    z = jax.block_until_ready(z)

    recon_ref, z_ref = svd_net_reference(frames, p_x, U,
                                         grid_size=GRID, n_channels=N_CHANNELS)

    assert recon.shape == (B, N_CHANNELS, *GRID), recon.shape
    assert z.shape == (B, META_LATENT), z.shape
    assert jnp.allclose(recon, recon_ref, atol=1e-4, rtol=1e-4), \
        float(jnp.max(jnp.abs(recon - recon_ref)))
    assert jnp.allclose(z, z_ref, atol=1e-4, rtol=1e-4), \
        float(jnp.max(jnp.abs(z - z_ref)))
    print("KERNEL_OK")
</pallas_src>

<mosaic_0001>
module attributes {stable_mosaic.version = 11 : i64} {
  func.func @svd_net_kernel(%arg0: i32, %arg1: memref<2x256xf32, #tpu.memory_space<vmem>>, %arg2: memref<2x16xf32, #tpu.memory_space<vmem>>, %arg3: memref<256x16xf32, #tpu.memory_space<vmem>>, %arg4: memref<16x256xf32, #tpu.memory_space<vmem>>, %arg5: memref<2x256xf32, #tpu.memory_space<vmem>>, %arg6: memref<2x16xf32, #tpu.memory_space<vmem>>) attributes {dimension_semantics = [#tpu.dimension_semantics<arbitrary>], iteration_bounds = array<i64: 1>, scalar_prefetch = 0 : i64, scratch_operands = 0 : i64, tpu.core_type = #tpu.core_type<tc>, window_params = [{pipeline_mode = #tpu.pipeline_mode<synchronous>, transform_indices = @transform_0, window_bounds = array<i64: 2, 256>}, {pipeline_mode = #tpu.pipeline_mode<synchronous>, transform_indices = @transform_1, window_bounds = array<i64: 2, 16>}, {pipeline_mode = #tpu.pipeline_mode<synchronous>, transform_indices = @transform_2, window_bounds = array<i64: 256, 16>}, {pipeline_mode = #tpu.pipeline_mode<synchronous>, transform_indices = @transform_3, window_bounds = array<i64: 16, 256>}, {pipeline_mode = #tpu.pipeline_mode<synchronous>, transform_indices = @transform_4, window_bounds = array<i64: 2, 256>}, {pipeline_mode = #tpu.pipeline_mode<synchronous>, transform_indices = @transform_5, window_bounds = array<i64: 2, 16>}]} {
    %c0 = arith.constant 0 : index
    %c0_0 = arith.constant 0 : index
    %0 = vector.load %arg1[%c0, %c0_0] : memref<2x256xf32, #tpu.memory_space<vmem>>, vector<2x256xf32>
    %c0_1 = arith.constant 0 : index
    %c0_2 = arith.constant 0 : index
    %1 = vector.load %arg3[%c0_1, %c0_2] : memref<256x16xf32, #tpu.memory_space<vmem>>, vector<256x16xf32>
    %cst = arith.constant dense<0.000000e+00> : vector<2x16xf32>
    %2 = tpu.matmul %0, %1, %cst {dimension_numbers = #tpu.dot_dimension_numbers<[1], [0], [0], [1], [0, 0, 1, 1], [], []>} : vector<2x256xf32>, vector<256x16xf32>, vector<2x16xf32> -> vector<2x16xf32>
    %c0_3 = arith.constant 0 : index
    %c0_4 = arith.constant 0 : index
    %3 = vector.load %arg2[%c0_3, %c0_4] : memref<2x16xf32, #tpu.memory_space<vmem>>, vector<2x16xf32>
    %4 = arith.addf %2, %3 : vector<2x16xf32>
    %c0_5 = arith.constant 0 : index
    %c0_6 = arith.constant 0 : index
    %5 = vector.load %arg6[%c0_5, %c0_6] : memref<2x16xf32, #tpu.memory_space<vmem>>, vector<2x16xf32>
    tpu.vector_store %arg6[%c0_5, %c0_6], %4 {strides = array<i32>} : memref<2x16xf32, #tpu.memory_space<vmem>>, vector<2x16xf32>,
    %c0_7 = arith.constant 0 : index
    %c0_8 = arith.constant 0 : index
    %6 = vector.load %arg4[%c0_7, %c0_8] : memref<16x256xf32, #tpu.memory_space<vmem>>, vector<16x256xf32>
    %cst_9 = arith.constant dense<0.000000e+00> : vector<2x256xf32>
    %7 = tpu.matmul %4, %6, %cst_9 {dimension_numbers = #tpu.dot_dimension_numbers<[1], [0], [0], [1], [0, 0, 1, 1], [], []>} : vector<2x16xf32>, vector<16x256xf32>, vector<2x256xf32> -> vector<2x256xf32>
    %c0_10 = arith.constant 0 : index
    %c0_11 = arith.constant 0 : index
    %8 = vector.load %arg5[%c0_10, %c0_11] : memref<2x256xf32, #tpu.memory_space<vmem>>, vector<2x256xf32>
    tpu.vector_store %arg5[%c0_10, %c0_11], %7 {strides = array<i32>} : memref<2x256xf32, #tpu.memory_space<vmem>>, vector<2x256xf32>,
    return
  }
  func.func @transform_0(%arg0: i32) -> (i32, i32) {
    %c0_i32 = arith.constant 0 : i32
    %c0_i32_0 = arith.constant 0 : i32
    %c0_i32_1 = arith.constant 0 : i32
    return %c0_i32, %c0_i32_0 : i32, i32
  }
  func.func @transform_1(%arg0: i32) -> (i32, i32) {
    %c0_i32 = arith.constant 0 : i32
    %c0_i32_0 = arith.constant 0 : i32
    %c0_i32_1 = arith.constant 0 : i32
    return %c0_i32, %c0_i32_0 : i32, i32
  }
  func.func @transform_2(%arg0: i32) -> (i32, i32) {
    %c0_i32 = arith.constant 0 : i32
    %c0_i32_0 = arith.constant 0 : i32
    %c0_i32_1 = arith.constant 0 : i32
    return %c0_i32, %c0_i32_0 : i32, i32
  }
  func.func @transform_3(%arg0: i32) -> (i32, i32) {
    %c0_i32 = arith.constant 0 : i32
    %c0_i32_0 = arith.constant 0 : i32
    %c0_i32_1 = arith.constant 0 : i32
    return %c0_i32, %c0_i32_0 : i32, i32
  }
  func.func @transform_4(%arg0: i32) -> (i32, i32) {
    %c0_i32 = arith.constant 0 : i32
    %c0_i32_0 = arith.constant 0 : i32
    %c0_i32_1 = arith.constant 0 : i32
    return %c0_i32, %c0_i32_0 : i32, i32
  }
  func.func @transform_5(%arg0: i32) -> (i32, i32) {
    %c0_i32 = arith.constant 0 : i32
    %c0_i32_0 = arith.constant 0 : i32
    %c0_i32_1 = arith.constant 0 : i32
    return %c0_i32, %c0_i32_0 : i32, i32
  }
}

</mosaic_0001>

<llo_original>
// kernel: tpu_custom_call.1
$region0: #{tpu_custom_call.1}
  #allocation0 [shape = 'u32[]', space=smem, size = 0x4, offset = 0x4, fixed_abs, tag = 'smem constant byte address 0x4 - core index']
  #allocation1 [shape = 'u32[72,128]{1,0:T(1,128)}', space=vmem, size = 0x9000, scoped, tag = 'internal scratch']
  %s0 = inlined_call_operand.vmem [shape: f32[2,256], index: 0, kind: input, shape index: {}]
  %s1 = inlined_call_operand.vmem [shape: f32[2,16], index: 1, kind: input, shape index: {}]
  %s2 = inlined_call_operand.vmem [shape: f32[256,16], index: 2, kind: input, shape index: {}]
  %s3 = inlined_call_operand.vmem [shape: f32[16,256], index: 3, kind: input, shape index: {}]
  %s4 = inlined_call_operand.hbm [shape: f32[2,256], index: 4, kind: output, shape index: {0}]
  %s5 = inlined_call_operand.hbm [shape: f32[2,16], index: 5, kind: output, shape index: {1}]
  %6 = xla_tuple %s4, %s5
  %s7 = sld [smem:[#allocation0]]
  $region34: #{tpu_custom_call.1} parent=0
    _
  %s9 = ssub.s32 1, %s7
  %s10 = scalar_select 0, %s9, %s7
  $region1: #{tpu_custom_call.1} parent=0
    #allocation2 [shape = 'u8[2048]{0}', space=vmem, size = 0x800, scoped, tag = 'output window, operand 0, single buffered']
    #allocation3 [shape = 's32[1]{0}', space=sflag, size = 0x4, scoped, tag = 'scoped memory for tpu_custom_call.1']
    #allocation4 [shape = 'u8[1024]{0}', space=vmem, size = 0x400, scoped, tag = 'output window, operand 1, single buffered']
    #allocation5 [shape = 's32[1]{0}', space=sflag, size = 0x4, scoped, tag = 'scoped memory for tpu_custom_call.1']
    %11 = vsyncpa [#allocation3], 0
    %12 = vsyncpa [#allocation5], 0
    // Predicated region
    $region2: #{tpu_custom_call.1} parent=1 // pred_check
      _
    $region3: #{tpu_custom_call.1} parent=1 // pred_check_branch
      %14 = sbr.rel (0) target = $region5
    $region4: #{tpu_custom_call.1} parent=1 // pred_region
      _
    $region5: #{tpu_custom_call.1} parent=1 // pred_fallthru
      _
    // Predicated region
    $region6: #{tpu_custom_call.1} parent=1 // pred_check
      _
    $region7: #{tpu_custom_call.1} parent=1 // pred_check_branch
      %16 = sbr.rel (0) target = $region9
    $region8: #{tpu_custom_call.1} parent=1 // pred_region
      _
    $region9: #{tpu_custom_call.1} parent=1 // pred_fallthru
      _
    // Predicated region
    $region10: #{tpu_custom_call.1} parent=1 // pred_check
      _
    $region11: #{tpu_custom_call.1} parent=1 // pred_check_branch
      %18 = sbr.rel (0) target = $region13
    $region12: #{tpu_custom_call.1} parent=1 // pred_region
      _
    $region13: #{tpu_custom_call.1} parent=1 // pred_fallthru
      _
    // Predicated region
    $region14: #{tpu_custom_call.1} parent=1 // pred_check
      _
    $region15: #{tpu_custom_call.1} parent=1 // pred_check_branch
      %20 = sbr.rel (0) target = $region17
    $region16: #{tpu_custom_call.1} parent=1 // pred_region
      _
    $region17: #{tpu_custom_call.1} parent=1 // pred_fallthru
      _
    %v21 = vld [vmem:[%s0] sm:$0xf]
    %v22 = vld [vmem:[%s2] sm:$0xff]
    %v23 = vld [vmem:[%s2 + $0x8] sm:$0xff]
    %v24 = vld [vmem:[%s2 + $0x10] sm:$0xff]
    %v25 = vld [vmem:[%s2 + $0x18] sm:$0xff]
    %v26 = vld [vmem:[%s2 + $0x20] sm:$0xff]
    %v27 = vld [vmem:[%s2 + $0x28] sm:$0xff]
    %v28 = vld [vmem:[%s2 + $0x30] sm:$0xff]
    %v29 = vld [vmem:[%s2 + $0x38] sm:$0xff]
    %v30 = vld [vmem:[%s2 + $0x40] sm:$0xff]
    %v31 = vld [vmem:[%s2 + $0x48] sm:$0xff]
    %v32 = vld [vmem:[%s2 + $0x50] sm:$0xff]
    %v33 = vld [vmem:[%s2 + $0x58] sm:$0xff]
    %v34 = vld [vmem:[%s2 + $0x60] sm:$0xff]
    %v35 = vld [vmem:[%s2 + $0x68] sm:$0xff]
    %v36 = vld [vmem:[%s2 + $0x70] sm:$0xff]
    %v37 = vld [vmem:[%s2 + $0x78] sm:$0xff]
    %v38 = vld [vmem:[%s2 + $0x80] sm:$0xff]
    %v39 = vld [vmem:[%s2 + $0x88] sm:$0xff]
    %v40 = vld [vmem:[%s2 + $0x90] sm:$0xff]
    %v41 = vld [vmem:[%s2 + $0x98] sm:$0xff]
    %v42 = vld [vmem:[%s2 + $0xa0] sm:$0xff]
    %v43 = vld [vmem:[%s2 + $0xa8] sm:$0xff]
    %v44 = vld [vmem:[%s2 + $0xb0] sm:$0xff]
    %v45 = vld [vmem:[%s2 + $0xb8] sm:$0xff]
    %v46 = vld [vmem:[%s2 + $0xc0] sm:$0xff]
    %v47 = vld [vmem:[%s2 + $0xc8] sm:$0xff]
    %v48 = vld [vmem:[%s2 + $0xd0] sm:$0xff]
    %v49 = vld [vmem:[%s2 + $0xd8] sm:$0xff]
    %v50 = vld [vmem:[%s2 + $0xe0] sm:$0xff]
    %v51 = vld [vmem:[%s2 + $0xe8] sm:$0xff]
    %v52 = vld [vmem:[%s2 + $0xf0] sm:$0xff]
    %v53 = vld [vmem:[%s2 + $0xf8] sm:$0xff]
    %v54 = vld [vmem:[%s1] sm:$0x3]
    %56 = vst [vmem:[#allocation1] ss:$4 sm:$0xff] %v21
    %v57 = vld.sshfl [vmem:[#allocation1] sm:$0xff pattern:$0x73625140]
    %v58 = vld.sshfl [vmem:[#allocation1 + $0x8] sm:$0xff pattern:$0x73625140]
    %61 = vmatpush.msra.mxu0 %v37
    %62 = vmatpush.msra.mxu0 %v36
    %63 = vmatpush.msra.mxu0 %v35
    %64 = vmatpush.msra.mxu0 %v34
    %65 = vmatpush.msra.mxu0 %v33
    %66 = vmatpush.msra.mxu0 %v32
    %67 = vmatpush.msra.mxu0 %v31
    %68 = vmatpush.msra.mxu0 %v30
    %69 = vmatpush.msra.mxu0 %v29
    %70 = vmatpush.msra.mxu0 %v28
    %71 = vmatpush.msra.mxu0 %v27
    %72 = vmatpush.msra.mxu0 %v26
    %73 = vmatpush.msra.mxu0 %v25
    %74 = vmatpush.msra.mxu0 %v24
    %75 = vmatpush.msra.mxu0 %v23
    %76 = vmatpush.msra.mxu0 %v22
    %77 = vmatmul.f32.gmra.mxu0 %v57
    %v78 = vpop.f32.mrf.mxu0
    %v79 = vadd.f32 %v54, %v78
    %80 = vdwg.mxu0
    %81 = vmatpush.msra.mxu0 %v53
    %82 = vmatpush.msra.mxu0 %v52
    %83 = vmatpush.msra.mxu0 %v51
    %84 = vmatpush.msra.mxu0 %v50
    %85 = vmatpush.msra.mxu0 %v49
    %86 = vmatpush.msra.mxu0 %v48
    %87 = vmatpush.msra.mxu0 %v47
    %88 = vmatpush.msra.mxu0 %v46
    %89 = vmatpush.msra.mxu0 %v45
    %90 = vmatpush.msra.mxu0 %v44
    %91 = vmatpush.msra.mxu0 %v43
    %92 = vmatpush.msra.mxu0 %v42
    %93 = vmatpush.msra.mxu0 %v41
    %94 = vmatpush.msra.mxu0 %v40
    %95 = vmatpush.msra.mxu0 %v39
    %96 = vmatpush.msra.mxu0 %v38
    %97 = vmatmul.f32.gmra.mxu0 %v58
    %v98 = vpop.f32.mrf.mxu0
    %v99 = vadd.f32 %v79, %v98
    %100 = vdwg.mxu0
    %vm101 = vcmask 123904
    %102 = vst.msk [vmem:[#allocation4] sm:$0x3] %vm101, %v99
    %v103 = vld [vmem:[%s3] sm:$0xff]
    %v104 = vld [vmem:[%s3 + $0x8] sm:$0xff]
    %v105 = vld [vmem:[%s3 + $0x10] sm:$0xff]
    %v106 = vld [vmem:[%s3 + $0x18] sm:$0xff]
    %vm107 = vcmask 130048
    %v109 = vsel %vm107, %v99, 0
    %111 = vmatpush.msra.mxu0 0.0
    %112 = vmatpush.msra.mxu0 0.0
    %113 = vmatpush.msra.mxu0 0.0
    %114 = vmatpush.msra.mxu0 0.0
    %115 = vmatpush.msra.mxu0 0.0
    %116 = vmatpush.msra.mxu0 0.0
    %117 = vmatpush.msra.mxu0 0.0
    %118 = vmatpush.msra.mxu0 0.0
    %119 = vmatpush.msra.mxu0 0.0
    %120 = vmatpush.msra.mxu0 0.0
    %121 = vmatpush.msra.mxu0 0.0
    %122 = vmatpush.msra.mxu0 0.0
    %123 = vmatpush.msra.mxu0 0.0
    %124 = vmatpush.msra.mxu0 0.0
    %125 = vmatpush.msra.mxu0 %v105
    %126 = vmatpush.msra.mxu0 %v103
    %127 = vmatmul.f32.gmra.mxu0 %v109
    %v128 = vpop.f32.mrf.mxu0
    %v129 = vadd.f32 0.0, %v128
    %130 = vdwg.mxu0
    %131 = vmatpush.msra.mxu0 0.0
    %132 = vmatpush.msra.mxu0 0.0
    %133 = vmatpush.msra.mxu0 0.0
    %134 = vmatpush.msra.mxu0 0.0
    %135 = vmatpush.msra.mxu0 0.0
    %136 = vmatpush.msra.mxu0 0.0
    %137 = vmatpush.msra.mxu0 0.0
    %138 = vmatpush.msra.mxu0 0.0
    %139 = vmatpush.msra.mxu0 0.0
    %140 = vmatpush.msra.mxu0 0.0
    %141 = vmatpush.msra.mxu0 0.0
    %142 = vmatpush.msra.mxu0 0.0
    %143 = vmatpush.msra.mxu0 0.0
    %144 = vmatpush.msra.mxu0 0.0
    %145 = vmatpush.msra.mxu0 %v106
    %146 = vmatpush.msra.mxu0 %v104
    %147 = vmatmul.f32.gmra.mxu0 %v109
    %v148 = vpop.f32.mrf.mxu0
    %v149 = vadd.f32 0.0, %v148
    %150 = vdwg.mxu0
    %v153 = vrot.slane %v149, 6
    %vm154 = vcmask 1041408
    %v155 = vsel %vm154, %v129, %v153
    %157 = vst [vmem:[#allocation2] sm:$0xf] %v155
    // Predicated region
    $region18: #{tpu_custom_call.1} parent=1 // pred_check
      _
    $region19: #{tpu_custom_call.1} parent=1 // pred_check_branch
      %159 = sbr.rel (0) target = $region21
    $region20: #{tpu_custom_call.1} parent=1 // pred_region
      %161 = vsyncadd [#allocation3], 0
      %s163 = sshll.u32 [#allocation2], 4
      %s164 = int_to_ptr.vmem [resolvable:$true] %s163
      %s165 = sshll.u32 %s4, 4
      %s166 = int_to_ptr.hbm [resolvable:$true] %s165
      %168 = dma.vmem_to_hbm [thread:$0]  %s164, 64, %s166, [#allocation3]
    $region21: #{tpu_custom_call.1} parent=1 // pred_fallthru
      _
    // Predicated region
    $region22: #{tpu_custom_call.1} parent=1 // pred_check
      _
    $region23: #{tpu_custom_call.1} parent=1 // pred_check_branch
      %170 = sbr.rel (0) target = $region25
    $region24: #{tpu_custom_call.1} parent=1 // pred_region
      %172 = vsyncadd [#allocation5], 0
      %s174 = sshll.u32 [#allocation4], 4
      %s175 = int_to_ptr.vmem [resolvable:$true] %s174
      %s176 = sshll.u32 %s5, 4
      %s177 = int_to_ptr.hbm [resolvable:$true] %s176
      %179 = dma.vmem_to_hbm [thread:$0]  %s175, 32, %s177, [#allocation5]
    $region25: #{tpu_custom_call.1} parent=1 // pred_fallthru
      _
    // Predicated region
    $region26: #{tpu_custom_call.1} parent=1 // pred_check
      _
    $region27: #{tpu_custom_call.1} parent=1 // pred_check_branch
      %181 = sbr.rel (0) target = $region29
    $region28: #{tpu_custom_call.1} parent=1 // pred_region
      %183 = dma.done [#allocation3], 64
    $region29: #{tpu_custom_call.1} parent=1 // pred_fallthru
      _
    // Predicated region
    $region30: #{tpu_custom_call.1} parent=1 // pred_check
      _
    $region31: #{tpu_custom_call.1} parent=1 // pred_check_branch
      %185 = sbr.rel (0) target = $region33
    $region32: #{tpu_custom_call.1} parent=1 // pred_region
      %187 = dma.done [#allocation5], 32
    $region33: #{tpu_custom_call.1} parent=1 // pred_fallthru
      _
    %188 = vsyncpa [#allocation3], 1
    %189 = vsyncpa [#allocation5], 1

</llo_original>
